<compile_context>
chip_gen: v6e
topology: v6e:2x2x1
jax: 0.10.0
libtpu: 0.0.40
codegen_flags: <defaults>
</compile_context>

<pallas_src>
import jax
import jax.numpy as jnp
from jax.experimental import pallas as pl
from jax.experimental.pallas import tpu as pltpu


def _sigmoid_mul_kernel(gate_ref, x_ref, o_ref):
    # gate_ref: (tile_nc, 1)   x_ref: (tile_nc, tile_hw)   o_ref: same as x_ref
    g = gate_ref[...].astype(jnp.float32)      # tiny column; exp -> EUP slot
    s = jax.nn.sigmoid(g)                      # always f32 (safe on v5e)
    x = x_ref[...]
    if x.dtype == jnp.float32:
        o_ref[...] = (s * x).astype(o_ref.dtype)
    else:
        # bf16/fp8 path: keep the big multiply in the native dtype; only the
        # gate column was upcast.  (On v5e the compiler upconverts internally.)
        o_ref[...] = (s.astype(x.dtype) * x).astype(o_ref.dtype)


def _round_up(x, m):
    return ((x + m - 1) // m) * m


# Total footprint budget for the pipelined blocks (inputs + output, each
# double-buffered).  Kept well under v5e's 16 MiB default scoped-VMEM limit.
_VMEM_BLOCK_BUDGET = 10 * 1024 * 1024
_MAX_LANE_BYTES_PER_ROW = 512 * 1024   # cap a single row's x block at 512 KiB
_SPLIT_THRESHOLD_BYTES = 2 * 1024 * 1024  # force >=2 row blocks above this


def _pick_tiles(nc, hw, x_itemsize):
    """Pick (tile_nc, tile_hw) with correct lane/sublane padding accounting."""
    # dtype-aware sublane packing: f32 -> 8, bf16 -> 16, int8/fp8 -> 32
    sub = max(8, 32 // x_itemsize)

    # Lane axis: keep the full H*W extent (always a legal block) unless a
    # single padded row is too wide, in which case chunk it in 128-multiples.
    padded_full_hw = _round_up(hw, 128)
    if padded_full_hw * x_itemsize <= _MAX_LANE_BYTES_PER_ROW:
        tile_hw = hw
        padded_hw = padded_full_hw
    else:
        tile_hw = max(128, (_MAX_LANE_BYTES_PER_ROW // x_itemsize) // 128 * 128)
        padded_hw = tile_hw

    # Per-row VMEM bytes: x-in + out (2 buffers each) + gate column padded to
    # 128 lanes (2 buffers).
    bytes_per_row = (2 * 2 * padded_hw * x_itemsize) + (2 * 128 * x_itemsize)
    max_rows = max(sub, _VMEM_BLOCK_BUDGET // bytes_per_row)
    tile_nc = min(nc, max_rows)

    # Give the pipeline (and v7x's second TensorCore) at least 2 row blocks
    # when there is enough data to make the extra grid step worthwhile.
    slab_bytes = nc * padded_full_hw * x_itemsize
    if slab_bytes > _SPLIT_THRESHOLD_BYTES:
        tile_nc = min(tile_nc, _round_up(pl.cdiv(nc, 2), sub))

    if tile_nc >= sub:
        tile_nc = (tile_nc // sub) * sub
    else:
        tile_nc = nc   # block == full array extent is always legal
    return tile_nc, tile_hw


def sigmoid_mul(x285, x281):
    """x285: (N, C, 1, 1), x281: (N, C, H, W)  ->  (N, C, H, W)"""
    n, c, h, w = x281.shape
    assert x285.shape == (n, c, 1, 1)

    nc, hw = n * c, h * w
    gate2d = x285.reshape(nc, 1)
    x2d = x281.reshape(nc, hw)

    itemsize = jnp.dtype(x281.dtype).itemsize
    tile_nc, tile_hw = _pick_tiles(nc, hw, itemsize)
    grid = (pl.cdiv(nc, tile_nc), pl.cdiv(hw, tile_hw))

    out2d = pl.pallas_call(
        _sigmoid_mul_kernel,
        out_shape=jax.ShapeDtypeStruct((nc, hw), x281.dtype),
        grid=grid,
        in_specs=[
            # gate column: follows the row axis, ignores the lane-chunk axis
            pl.BlockSpec((tile_nc, 1), lambda i, j: (i, 0)),
            pl.BlockSpec((tile_nc, tile_hw), lambda i, j: (i, j)),
        ],
        out_specs=pl.BlockSpec((tile_nc, tile_hw), lambda i, j: (i, j)),
        compiler_params=pltpu.CompilerParams(
            dimension_semantics=("parallel", "parallel"),
        ),
    )(gate2d, x2d)

    return out2d.reshape(n, c, h, w)


def _check(x285, x281, tol):
    out = sigmoid_mul(x285, x281)
    jax.block_until_ready(out)
    ref = (jax.nn.sigmoid(x285.astype(jnp.float32))
           * x281.astype(jnp.float32)).astype(x281.dtype)
    assert out.shape == x281.shape
    assert out.dtype == x281.dtype
    assert jnp.allclose(out.astype(jnp.float32), ref.astype(jnp.float32),
                        atol=tol, rtol=tol), "mismatch vs reference"


if __name__ == "__main__":
    key = jax.random.PRNGKey(0)
    k1, k2, k3, k4, k5, k6 = jax.random.split(key, 6)

    # 1) Shapes from the PyTorch module: x281=[1,816,7,7], x285=[1,816,1,1]
    x281 = jax.random.normal(k1, (1, 816, 7, 7), dtype=jnp.float32)
    x285 = jax.random.normal(k2, (1, 816, 1, 1), dtype=jnp.float32)
    _check(x285, x281, tol=1e-6)

    # 2) Larger f32 case that exercises the multi-row-block (pipelined) path.
    xb = jax.random.normal(k3, (4, 96, 56, 56), dtype=jnp.float32)
    gb = jax.random.normal(k4, (4, 96, 1, 1), dtype=jnp.float32)
    _check(gb, xb, tol=1e-6)

    # 3) Small bf16 case exercising the native-dtype multiply path.
    xc = jax.random.normal(k5, (2, 32, 14, 14), dtype=jnp.bfloat16)
    gc = jax.random.normal(k6, (2, 32, 1, 1), dtype=jnp.bfloat16)
    _check(gc, xc, tol=2e-2)

    print("KERNEL_OK")
</pallas_src>

<mosaic_0001>
module attributes {stable_mosaic.version = 11 : i64} {
  func.func @_sigmoid_mul_kernel(%arg0: i32, %arg1: i32, %arg2: memref<816x1xf32, #tpu.memory_space<vmem>>, %arg3: memref<816x49xf32, #tpu.memory_space<vmem>>, %arg4: memref<816x49xf32, #tpu.memory_space<vmem>>) attributes {dimension_semantics = [#tpu.dimension_semantics<parallel>, #tpu.dimension_semantics<parallel>], iteration_bounds = array<i64: 1, 1>, scalar_prefetch = 0 : i64, scratch_operands = 0 : i64, tpu.core_type = #tpu.core_type<tc>, window_params = [{transform_indices = @transform_0, window_bounds = array<i64: 816, 1>}, {transform_indices = @transform_1, window_bounds = array<i64: 816, 49>}, {transform_indices = @transform_2, window_bounds = array<i64: 816, 49>}]} {
    %c0 = arith.constant 0 : index
    %c0_0 = arith.constant 0 : index
    %0 = vector.load %arg2[%c0, %c0_0] : memref<816x1xf32, #tpu.memory_space<vmem>>, vector<816x1xf32>
    %1 = arith.negf %0 : vector<816x1xf32>
    %2 = math.exp %1 : vector<816x1xf32>
    %cst = arith.constant 1.000000e+00 : f32
    %3 = vector.broadcast %cst : f32 to vector<816x1xf32>
    %4 = arith.addf %3, %2 : vector<816x1xf32>
    %5 = arith.divf %3, %4 : vector<816x1xf32>
    %c0_1 = arith.constant 0 : index
    %c0_2 = arith.constant 0 : index
    %6 = vector.load %arg3[%c0_1, %c0_2] : memref<816x49xf32, #tpu.memory_space<vmem>>, vector<816x49xf32>
    %7 = vector.broadcast %5 : vector<816x1xf32> to vector<816x49xf32>
    %8 = arith.mulf %7, %6 : vector<816x49xf32>
    %c0_3 = arith.constant 0 : index
    %c0_4 = arith.constant 0 : index
    %9 = vector.load %arg4[%c0_3, %c0_4] : memref<816x49xf32, #tpu.memory_space<vmem>>, vector<816x49xf32>
    tpu.vector_store %arg4[%c0_3, %c0_4], %8 {strides = array<i32>} : memref<816x49xf32, #tpu.memory_space<vmem>>, vector<816x49xf32>,
    return
  }
  func.func @transform_0(%arg0: i32, %arg1: i32) -> (i32, i32) {
    %c0_i32 = arith.constant 0 : i32
    %c0_i32_0 = arith.constant 0 : i32
    return %arg0, %c0_i32 : i32, i32
  }
  func.func @transform_1(%arg0: i32, %arg1: i32) -> (i32, i32) {
    %c0_i32 = arith.constant 0 : i32
    return %arg0, %arg1 : i32, i32
  }
  func.func @transform_2(%arg0: i32, %arg1: i32) -> (i32, i32) {
    %c0_i32 = arith.constant 0 : i32
    return %arg0, %arg1 : i32, i32
  }
}

</mosaic_0001>

<llo_original>
// kernel: tpu_custom_call.1
$region0: #{tpu_custom_call.1}
  #allocation0 [shape = 'u32[]', space=smem, size = 0x4, offset = 0x4, fixed_abs, tag = 'smem constant byte address 0x4 - core index']
  #allocation1 [shape = 'u32[144,128]{1,0:T(1,128)}', space=vmem, size = 0x12000, scoped, tag = 'internal scratch']
  %s0 = inlined_call_operand.vmem [shape: f32[816,1], index: 0, kind: input, shape index: {}]
  %s1 = inlined_call_operand.vmem [shape: f32[816,49], index: 1, kind: input, shape index: {}]
  %s2 = inlined_call_operand.vmem [shape: f32[816,49], index: 2, kind: output, shape index: {}]
  %s3 = sld [smem:[#allocation0]]
  $region18: #{tpu_custom_call.1} parent=0
    _
  %s5 = ssub.s32 1, %s3
  %s6 = scalar_select 0, %s5, %s3
  // Predicated region
  $region2: #{tpu_custom_call.1} parent=0 // pred_check
    _
  $region3: #{tpu_custom_call.1} parent=0 // pred_check_branch
    %8 = sbr.rel (0) target = $region5
  $region4: #{tpu_custom_call.1} parent=0 // pred_region
    _
  $region5: #{tpu_custom_call.1} parent=0 // pred_fallthru
    _
  // Predicated region
  $region6: #{tpu_custom_call.1} parent=0 // pred_check
    _
  $region7: #{tpu_custom_call.1} parent=0 // pred_check_branch
    %10 = sbr.rel (0) target = $region9
  $region8: #{tpu_custom_call.1} parent=0 // pred_region
    _
  $region9: #{tpu_custom_call.1} parent=0 // pred_fallthru
    _
  %v11 = vld [vmem:[%s0] sm:$0xff]
  %v12 = vld [vmem:[%s0 + $0x8] sm:$0xff]
  %v13 = vld [vmem:[%s0 + $0x10] sm:$0xff]
  %v14 = vld [vmem:[%s0 + $0x18] sm:$0xff]
  %v15 = vld [vmem:[%s0 + $0x20] sm:$0xff]
  %v16 = vld [vmem:[%s0 + $0x28] sm:$0xff]
  %v17 = vld [vmem:[%s0 + $0x30] sm:$0xff]
  %v18 = vld [vmem:[%s0 + $0x38] sm:$0xff]
  %v19 = vld [vmem:[%s0 + $0x40] sm:$0xff]
  %v20 = vld [vmem:[%s0 + $0x48] sm:$0xff]
  %v21 = vld [vmem:[%s0 + $0x50] sm:$0xff]
  %v22 = vld [vmem:[%s0 + $0x58] sm:$0xff]
  %v23 = vld [vmem:[%s0 + $0x60] sm:$0xff]
  %v24 = vld [vmem:[%s0 + $0x68] sm:$0xff]
  %v25 = vld [vmem:[%s0 + $0x70] sm:$0xff]
  %v26 = vld [vmem:[%s0 + $0x78] sm:$0xff]
  %v27 = vld [vmem:[%s0 + $0x80] sm:$0xff]
  %v28 = vld [vmem:[%s0 + $0x88] sm:$0xff]
  %v29 = vld [vmem:[%s0 + $0x90] sm:$0xff]
  %v30 = vld [vmem:[%s0 + $0x98] sm:$0xff]
  %v31 = vld [vmem:[%s0 + $0xa0] sm:$0xff]
  %v32 = vld [vmem:[%s0 + $0xa8] sm:$0xff]
  %v33 = vld [vmem:[%s0 + $0xb0] sm:$0xff]
  %v34 = vld [vmem:[%s0 + $0xb8] sm:$0xff]
  %v35 = vld [vmem:[%s0 + $0xc0] sm:$0xff]
  %v36 = vld [vmem:[%s0 + $0xc8] sm:$0xff]
  %v37 = vld [vmem:[%s0 + $0xd0] sm:$0xff]
  %v38 = vld [vmem:[%s0 + $0xd8] sm:$0xff]
  %v39 = vld [vmem:[%s0 + $0xe0] sm:$0xff]
  %v40 = vld [vmem:[%s0 + $0xe8] sm:$0xff]
  %v41 = vld [vmem:[%s0 + $0xf0] sm:$0xff]
  %v42 = vld [vmem:[%s0 + $0xf8] sm:$0xff]
  %v43 = vld [vmem:[%s0 + $0x100] sm:$0xff]
  %v44 = vld [vmem:[%s0 + $0x108] sm:$0xff]
  %v45 = vld [vmem:[%s0 + $0x110] sm:$0xff]
  %v46 = vld [vmem:[%s0 + $0x118] sm:$0xff]
  %v47 = vld [vmem:[%s0 + $0x120] sm:$0xff]
  %v48 = vld [vmem:[%s0 + $0x128] sm:$0xff]
  %v49 = vld [vmem:[%s0 + $0x130] sm:$0xff]
  %v50 = vld [vmem:[%s0 + $0x138] sm:$0xff]
  %v51 = vld [vmem:[%s0 + $0x140] sm:$0xff]
  %v52 = vld [vmem:[%s0 + $0x148] sm:$0xff]
  %v53 = vld [vmem:[%s0 + $0x150] sm:$0xff]
  %v54 = vld [vmem:[%s0 + $0x158] sm:$0xff]
  %v55 = vld [vmem:[%s0 + $0x160] sm:$0xff]
  %v56 = vld [vmem:[%s0 + $0x168] sm:$0xff]
  %v57 = vld [vmem:[%s0 + $0x170] sm:$0xff]
  %v58 = vld [vmem:[%s0 + $0x178] sm:$0xff]
  %v59 = vld [vmem:[%s0 + $0x180] sm:$0xff]
  %v60 = vld [vmem:[%s0 + $0x188] sm:$0xff]
  %v61 = vld [vmem:[%s0 + $0x190] sm:$0xff]
  %v62 = vld [vmem:[%s0 + $0x198] sm:$0xff]
  %v63 = vld [vmem:[%s0 + $0x1a0] sm:$0xff]
  %v64 = vld [vmem:[%s0 + $0x1a8] sm:$0xff]
  %v65 = vld [vmem:[%s0 + $0x1b0] sm:$0xff]
  %v66 = vld [vmem:[%s0 + $0x1b8] sm:$0xff]
  %v67 = vld [vmem:[%s0 + $0x1c0] sm:$0xff]
  %v68 = vld [vmem:[%s0 + $0x1c8] sm:$0xff]
  %v69 = vld [vmem:[%s0 + $0x1d0] sm:$0xff]
  %v70 = vld [vmem:[%s0 + $0x1d8] sm:$0xff]
  %v71 = vld [vmem:[%s0 + $0x1e0] sm:$0xff]
  %v72 = vld [vmem:[%s0 + $0x1e8] sm:$0xff]
  %v73 = vld [vmem:[%s0 + $0x1f0] sm:$0xff]
  %v74 = vld [vmem:[%s0 + $0x1f8] sm:$0xff]
  %v75 = vld [vmem:[%s0 + $0x200] sm:$0xff]
  %v76 = vld [vmem:[%s0 + $0x208] sm:$0xff]
  %v77 = vld [vmem:[%s0 + $0x210] sm:$0xff]
  %v78 = vld [vmem:[%s0 + $0x218] sm:$0xff]
  %v79 = vld [vmem:[%s0 + $0x220] sm:$0xff]
  %v80 = vld [vmem:[%s0 + $0x228] sm:$0xff]
  %v81 = vld [vmem:[%s0 + $0x230] sm:$0xff]
  %v82 = vld [vmem:[%s0 + $0x238] sm:$0xff]
  %v83 = vld [vmem:[%s0 + $0x240] sm:$0xff]
  %v84 = vld [vmem:[%s0 + $0x248] sm:$0xff]
  %v85 = vld [vmem:[%s0 + $0x250] sm:$0xff]
  %v86 = vld [vmem:[%s0 + $0x258] sm:$0xff]
  %v87 = vld [vmem:[%s0 + $0x260] sm:$0xff]
  %v88 = vld [vmem:[%s0 + $0x268] sm:$0xff]
  %v89 = vld [vmem:[%s0 + $0x270] sm:$0xff]
  %v90 = vld [vmem:[%s0 + $0x278] sm:$0xff]
  %v91 = vld [vmem:[%s0 + $0x280] sm:$0xff]
  %v92 = vld [vmem:[%s0 + $0x288] sm:$0xff]
  %v93 = vld [vmem:[%s0 + $0x290] sm:$0xff]
  %v94 = vld [vmem:[%s0 + $0x298] sm:$0xff]
  %v95 = vld [vmem:[%s0 + $0x2a0] sm:$0xff]
  %v96 = vld [vmem:[%s0 + $0x2a8] sm:$0xff]
  %v97 = vld [vmem:[%s0 + $0x2b0] sm:$0xff]
  %v98 = vld [vmem:[%s0 + $0x2b8] sm:$0xff]
  %v99 = vld [vmem:[%s0 + $0x2c0] sm:$0xff]
  %v100 = vld [vmem:[%s0 + $0x2c8] sm:$0xff]
  %v101 = vld [vmem:[%s0 + $0x2d0] sm:$0xff]
  %v102 = vld [vmem:[%s0 + $0x2d8] sm:$0xff]
  %v103 = vld [vmem:[%s0 + $0x2e0] sm:$0xff]
  %v104 = vld [vmem:[%s0 + $0x2e8] sm:$0xff]
  %v105 = vld [vmem:[%s0 + $0x2f0] sm:$0xff]
  %v106 = vld [vmem:[%s0 + $0x2f8] sm:$0xff]
  %v107 = vld [vmem:[%s0 + $0x300] sm:$0xff]
  %v108 = vld [vmem:[%s0 + $0x308] sm:$0xff]
  %v109 = vld [vmem:[%s0 + $0x310] sm:$0xff]
  %v110 = vld [vmem:[%s0 + $0x318] sm:$0xff]
  %v111 = vld [vmem:[%s0 + $0x320] sm:$0xff]
  %v112 = vld [vmem:[%s0 + $0x328] sm:$0xff]
  %v113 = vxor.u32 %v11, 2147483648
  %v114 = vxor.u32 %v12, 2147483648
  %v115 = vxor.u32 %v13, 2147483648
  %v116 = vxor.u32 %v14, 2147483648
  %v117 = vxor.u32 %v15, 2147483648
  %v118 = vxor.u32 %v16, 2147483648
  %v119 = vxor.u32 %v17, 2147483648
  %v120 = vxor.u32 %v18, 2147483648
  %v121 = vxor.u32 %v19, 2147483648
  %v122 = vxor.u32 %v20, 2147483648
  %v123 = vxor.u32 %v21, 2147483648
  %v124 = vxor.u32 %v22, 2147483648
  %v125 = vxor.u32 %v23, 2147483648
  %v126 = vxor.u32 %v24, 2147483648
  %v127 = vxor.u32 %v25, 2147483648
  %v128 = vxor.u32 %v26, 2147483648
  %v129 = vxor.u32 %v27, 2147483648
  %v130 = vxor.u32 %v28, 2147483648
  %v131 = vxor.u32 %v29, 2147483648
  %v132 = vxor.u32 %v30, 2147483648
  %v133 = vxor.u32 %v31, 2147483648
  %v134 = vxor.u32 %v32, 2147483648
  %v135 = vxor.u32 %v33, 2147483648
  %v136 = vxor.u32 %v34, 2147483648
  %v137 = vxor.u32 %v35, 2147483648
  %v138 = vxor.u32 %v36, 2147483648
  %v139 = vxor.u32 %v37, 2147483648
  %v140 = vxor.u32 %v38, 2147483648
  %v141 = vxor.u32 %v39, 2147483648
  %v142 = vxor.u32 %v40, 2147483648
  %v143 = vxor.u32 %v41, 2147483648
  %v144 = vxor.u32 %v42, 2147483648
  %v145 = vxor.u32 %v43, 2147483648
  %v146 = vxor.u32 %v44, 2147483648
  %v147 = vxor.u32 %v45, 2147483648
  %v148 = vxor.u32 %v46, 2147483648
  %v149 = vxor.u32 %v47, 2147483648
  %v150 = vxor.u32 %v48, 2147483648
  %v151 = vxor.u32 %v49, 2147483648
  %v152 = vxor.u32 %v50, 2147483648
  %v153 = vxor.u32 %v51, 2147483648
  %v154 = vxor.u32 %v52, 2147483648
  %v155 = vxor.u32 %v53, 2147483648
  %v156 = vxor.u32 %v54, 2147483648
  %v157 = vxor.u32 %v55, 2147483648
  %v158 = vxor.u32 %v56, 2147483648
  %v159 = vxor.u32 %v57, 2147483648
  %v160 = vxor.u32 %v58, 2147483648
  %v161 = vxor.u32 %v59, 2147483648
  %v162 = vxor.u32 %v60, 2147483648
  %v163 = vxor.u32 %v61, 2147483648
  %v164 = vxor.u32 %v62, 2147483648
  %v165 = vxor.u32 %v63, 2147483648
  %v166 = vxor.u32 %v64, 2147483648
  %v167 = vxor.u32 %v65, 2147483648
  %v168 = vxor.u32 %v66, 2147483648
  %v169 = vxor.u32 %v67, 2147483648
  %v170 = vxor.u32 %v68, 2147483648
  %v171 = vxor.u32 %v69, 2147483648
  %v172 = vxor.u32 %v70, 2147483648
  %v173 = vxor.u32 %v71, 2147483648
  %v174 = vxor.u32 %v72, 2147483648
  %v175 = vxor.u32 %v73, 2147483648
  %v176 = vxor.u32 %v74, 2147483648
  %v177 = vxor.u32 %v75, 2147483648
  %v178 = vxor.u32 %v76, 2147483648
  %v179 = vxor.u32 %v77, 2147483648
  %v180 = vxor.u32 %v78, 2147483648
  %v181 = vxor.u32 %v79, 2147483648
  %v182 = vxor.u32 %v80, 2147483648
  %v183 = vxor.u32 %v81, 2147483648
  %v184 = vxor.u32 %v82, 2147483648
  %v185 = vxor.u32 %v83, 2147483648
  %v186 = vxor.u32 %v84, 2147483648
  %v187 = vxor.u32 %v85, 2147483648
  %v188 = vxor.u32 %v86, 2147483648
  %v189 = vxor.u32 %v87, 2147483648
  %v190 = vxor.u32 %v88, 2147483648
  %v191 = vxor.u32 %v89, 2147483648
  %v192 = vxor.u32 %v90, 2147483648
  %v193 = vxor.u32 %v91, 2147483648
  %v194 = vxor.u32 %v92, 2147483648
  %v195 = vxor.u32 %v93, 2147483648
  %v196 = vxor.u32 %v94, 2147483648
  %v197 = vxor.u32 %v95, 2147483648
  %v198 = vxor.u32 %v96, 2147483648
  %v199 = vxor.u32 %v97, 2147483648
  %v200 = vxor.u32 %v98, 2147483648
  %v201 = vxor.u32 %v99, 2147483648
  %v202 = vxor.u32 %v100, 2147483648
  %v203 = vxor.u32 %v101, 2147483648
  %v204 = vxor.u32 %v102, 2147483648
  %v205 = vxor.u32 %v103, 2147483648
  %v206 = vxor.u32 %v104, 2147483648
  %v207 = vxor.u32 %v105, 2147483648
  %v208 = vxor.u32 %v106, 2147483648
  %v209 = vxor.u32 %v107, 2147483648
  %v210 = vxor.u32 %v108, 2147483648
  %v211 = vxor.u32 %v109, 2147483648
  %v212 = vxor.u32 %v110, 2147483648
  %v213 = vxor.u32 %v111, 2147483648
  %v214 = vxor.u32 %v112, 2147483648
  %v215 = vmul.f32 %v113, 1.442695
  %v216 = vpow.pop %v215
  %v217 = vmul.f32 %v114, 1.442695
  %v218 = vpow.pop %v217
  %v219 = vmul.f32 %v115, 1.442695
  %v220 = vpow.pop %v219
  %v221 = vmul.f32 %v116, 1.442695
  %v222 = vpow.pop %v221
  %v223 = vmul.f32 %v117, 1.442695
  %v224 = vpow.pop %v223
  %v225 = vmul.f32 %v118, 1.442695
  %v226 = vpow.pop %v225
  %v227 = vmul.f32 %v119, 1.442695
  %v228 = vpow.pop %v227
  %v229 = vmul.f32 %v120, 1.442695
  %v230 = vpow.pop %v229
  %v231 = vmul.f32 %v121, 1.442695
  %v232 = vpow.pop %v231
  %v233 = vmul.f32 %v122, 1.442695
  %v234 = vpow.pop %v233
  %v235 = vmul.f32 %v123, 1.442695
  %v236 = vpow.pop %v235
  %v237 = vmul.f32 %v124, 1.442695
  %v238 = vpow.pop %v237
  %v239 = vmul.f32 %v125, 1.442695
  %v240 = vpow.pop %v239
  %v241 = vmul.f32 %v126, 1.442695
  %v242 = vpow.pop %v241
  %v243 = vmul.f32 %v127, 1.442695
  %v244 = vpow.pop %v243
  %v245 = vmul.f32 %v128, 1.442695
  %v246 = vpow.pop %v245
  %v247 = vmul.f32 %v129, 1.442695
  %v248 = vpow.pop %v247
  %v249 = vmul.f32 %v130, 1.442695
  %v250 = vpow.pop %v249
  %v251 = vmul.f32 %v131, 1.442695
  %v252 = vpow.pop %v251
  %v253 = vmul.f32 %v132, 1.442695
  %v254 = vpow.pop %v253
  %v255 = vmul.f32 %v133, 1.442695
  %v256 = vpow.pop %v255
  %v257 = vmul.f32 %v134, 1.442695
  %v258 = vpow.pop %v257
  %v259 = vmul.f32 %v135, 1.442695
  %v260 = vpow.pop %v259
  %v261 = vmul.f32 %v136, 1.442695
  %v262 = vpow.pop %v261
  %v263 = vmul.f32 %v137, 1.442695
  %v264 = vpow.pop %v263
  %v265 = vmul.f32 %v138, 1.442695
  %v266 = vpow.pop %v265
  %v267 = vmul.f32 %v139, 1.442695
  %v268 = vpow.pop %v267
  %v269 = vmul.f32 %v140, 1.442695
  %v270 = vpow.pop %v269
  %v271 = vmul.f32 %v141, 1.442695
  %v272 = vpow.pop %v271
  %v273 = vmul.f32 %v142, 1.442695
  %v274 = vpow.pop %v273
  %v275 = vmul.f32 %v143, 1.442695
  %v276 = vpow.pop %v275
  %v277 = vmul.f32 %v144, 1.442695
  %v278 = vpow.pop %v277
  %v279 = vmul.f32 %v145, 1.442695
  %v280 = vpow.pop %v279
  %v281 = vmul.f32 %v146, 1.442695
  %v282 = vpow.pop %v281
  %v283 = vmul.f32 %v147, 1.442695
  %v284 = vpow.pop %v283
  %v285 = vmul.f32 %v148, 1.442695
  %v286 = vpow.pop %v285
  %v287 = vmul.f32 %v149, 1.442695
  %v288 = vpow.pop %v287
  %v289 = vmul.f32 %v150, 1.442695
  %v290 = vpow.pop %v289
  %v291 = vmul.f32 %v151, 1.442695
  %v292 = vpow.pop %v291
  %v293 = vmul.f32 %v152, 1.442695
  %v294 = vpow.pop %v293
  %v295 = vmul.f32 %v153, 1.442695
  %v296 = vpow.pop %v295
  %v297 = vmul.f32 %v154, 1.442695
  %v298 = vpow.pop %v297
  %v299 = vmul.f32 %v155, 1.442695
  %v300 = vpow.pop %v299
  %v301 = vmul.f32 %v156, 1.442695
  %v302 = vpow.pop %v301
  %v303 = vmul.f32 %v157, 1.442695
  %v304 = vpow.pop %v303
  %v305 = vmul.f32 %v158, 1.442695
  %v306 = vpow.pop %v305
  %v307 = vmul.f32 %v159, 1.442695
  %v308 = vpow.pop %v307
  %v309 = vmul.f32 %v160, 1.442695
  %v310 = vpow.pop %v309
  %v311 = vmul.f32 %v161, 1.442695
  %v312 = vpow.pop %v311
  %v313 = vmul.f32 %v162, 1.442695
  %v314 = vpow.pop %v313
  %v315 = vmul.f32 %v163, 1.442695
  %v316 = vpow.pop %v315
  %v317 = vmul.f32 %v164, 1.442695
  %v318 = vpow.pop %v317
  %v319 = vmul.f32 %v165, 1.442695
  %v320 = vpow.pop %v319
  %v321 = vmul.f32 %v166, 1.442695
  %v322 = vpow.pop %v321
  %v323 = vmul.f32 %v167, 1.442695
  %v324 = vpow.pop %v323
  %v325 = vmul.f32 %v168, 1.442695
  %v326 = vpow.pop %v325
  %v327 = vmul.f32 %v169, 1.442695
  %v328 = vpow.pop %v327
  %v329 = vmul.f32 %v170, 1.442695
  %v330 = vpow.pop %v329
  %v331 = vmul.f32 %v171, 1.442695
  %v332 = vpow.pop %v331
  %v333 = vmul.f32 %v172, 1.442695
  %v334 = vpow.pop %v333
  %v335 = vmul.f32 %v173, 1.442695
  %v336 = vpow.pop %v335
  %v337 = vmul.f32 %v174, 1.442695
  %v338 = vpow.pop %v337
  %v339 = vmul.f32 %v175, 1.442695
  %v340 = vpow.pop %v339
  %v341 = vmul.f32 %v176, 1.442695
  %v342 = vpow.pop %v341
  %v343 = vmul.f32 %v177, 1.442695
  %v344 = vpow.pop %v343
  %v345 = vmul.f32 %v178, 1.442695
  %v346 = vpow.pop %v345
  %v347 = vmul.f32 %v179, 1.442695
  %v348 = vpow.pop %v347
  %v349 = vmul.f32 %v180, 1.442695
  %v350 = vpow.pop %v349
  %v351 = vmul.f32 %v181, 1.442695
  %v352 = vpow.pop %v351
  %v353 = vmul.f32 %v182, 1.442695
  %v354 = vpow.pop %v353
  %v355 = vmul.f32 %v183, 1.442695
  %v356 = vpow.pop %v355
  %v357 = vmul.f32 %v184, 1.442695
  %v358 = vpow.pop %v357
  %v359 = vmul.f32 %v185, 1.442695
  %v360 = vpow.pop %v359
  %v361 = vmul.f32 %v186, 1.442695
  %v362 = vpow.pop %v361
  %v363 = vmul.f32 %v187, 1.442695
  %v364 = vpow.pop %v363
  %v365 = vmul.f32 %v188, 1.442695
  %v366 = vpow.pop %v365
  %v367 = vmul.f32 %v189, 1.442695
  %v368 = vpow.pop %v367
  %v369 = vmul.f32 %v190, 1.442695
  %v370 = vpow.pop %v369
  %v371 = vmul.f32 %v191, 1.442695
  %v372 = vpow.pop %v371
  %v373 = vmul.f32 %v192, 1.442695
  %v374 = vpow.pop %v373
  %v375 = vmul.f32 %v193, 1.442695
  %v376 = vpow.pop %v375
  %v377 = vmul.f32 %v194, 1.442695
  %v378 = vpow.pop %v377
  %v379 = vmul.f32 %v195, 1.442695
  %v380 = vpow.pop %v379
  %v381 = vmul.f32 %v196, 1.442695
  %v382 = vpow.pop %v381
  %v383 = vmul.f32 %v197, 1.442695
  %v384 = vpow.pop %v383
  %v385 = vmul.f32 %v198, 1.442695
  %v386 = vpow.pop %v385
  %v387 = vmul.f32 %v199, 1.442695
  %v388 = vpow.pop %v387
  %v389 = vmul.f32 %v200, 1.442695
  %v390 = vpow.pop %v389
  %v391 = vmul.f32 %v201, 1.442695
  %v392 = vpow.pop %v391
  %v393 = vmul.f32 %v202, 1.442695
  %v394 = vpow.pop %v393
  %v395 = vmul.f32 %v203, 1.442695
  %v396 = vpow.pop %v395
  %v397 = vmul.f32 %v204, 1.442695
  %v398 = vpow.pop %v397
  %v399 = vmul.f32 %v205, 1.442695
  %v400 = vpow.pop %v399
  %v401 = vmul.f32 %v206, 1.442695
  %v402 = vpow.pop %v401
  %v403 = vmul.f32 %v207, 1.442695
  %v404 = vpow.pop %v403
  %v405 = vmul.f32 %v208, 1.442695
  %v406 = vpow.pop %v405
  %v407 = vmul.f32 %v209, 1.442695
  %v408 = vpow.pop %v407
  %v409 = vmul.f32 %v210, 1.442695
  %v410 = vpow.pop %v409
  %v411 = vmul.f32 %v211, 1.442695
  %v412 = vpow.pop %v411
  %v413 = vmul.f32 %v212, 1.442695
  %v414 = vpow.pop %v413
  %v415 = vmul.f32 %v213, 1.442695
  %v416 = vpow.pop %v415
  %v417 = vmul.f32 %v214, 1.442695
  %v418 = vpow.pop %v417
  %v419 = vadd.f32 %v216, 1.0
  %v420 = vadd.f32 %v218, 1.0
  %v421 = vadd.f32 %v220, 1.0
  %v422 = vadd.f32 %v222, 1.0
  %v423 = vadd.f32 %v224, 1.0
  %v424 = vadd.f32 %v226, 1.0
  %v425 = vadd.f32 %v228, 1.0
  %v426 = vadd.f32 %v230, 1.0
  %v427 = vadd.f32 %v232, 1.0
  %v428 = vadd.f32 %v234, 1.0
  %v429 = vadd.f32 %v236, 1.0
  %v430 = vadd.f32 %v238, 1.0
  %v431 = vadd.f32 %v240, 1.0
  %v432 = vadd.f32 %v242, 1.0
  %v433 = vadd.f32 %v244, 1.0
  %v434 = vadd.f32 %v246, 1.0
  %v435 = vadd.f32 %v248, 1.0
  %v436 = vadd.f32 %v250, 1.0
  %v437 = vadd.f32 %v252, 1.0
  %v438 = vadd.f32 %v254, 1.0
  %v439 = vadd.f32 %v256, 1.0
  %v440 = vadd.f32 %v258, 1.0
  %v441 = vadd.f32 %v260, 1.0
  %v442 = vadd.f32 %v262, 1.0
  %v443 = vadd.f32 %v264, 1.0
  %v444 = vadd.f32 %v266, 1.0
  %v445 = vadd.f32 %v268, 1.0
  %v446 = vadd.f32 %v270, 1.0
  %v447 = vadd.f32 %v272, 1.0
  %v448 = vadd.f32 %v274, 1.0
  %v449 = vadd.f32 %v276, 1.0
  %v450 = vadd.f32 %v278, 1.0
  %v451 = vadd.f32 %v280, 1.0
  %v452 = vadd.f32 %v282, 1.0
  %v453 = vadd.f32 %v284, 1.0
  %v454 = vadd.f32 %v286, 1.0
  %v455 = vadd.f32 %v288, 1.0
  %v456 = vadd.f32 %v290, 1.0
  %v457 = vadd.f32 %v292, 1.0
  %v458 = vadd.f32 %v294, 1.0
  %v459 = vadd.f32 %v296, 1.0
  %v460 = vadd.f32 %v298, 1.0
  %v461 = vadd.f32 %v300, 1.0
  %v462 = vadd.f32 %v302, 1.0
  %v463 = vadd.f32 %v304, 1.0
  %v464 = vadd.f32 %v306, 1.0
  %v465 = vadd.f32 %v308, 1.0
  %v466 = vadd.f32 %v310, 1.0
  %v467 = vadd.f32 %v312, 1.0
  %v468 = vadd.f32 %v314, 1.0
  %v469 = vadd.f32 %v316, 1.0
  %v470 = vadd.f32 %v318, 1.0
  %v471 = vadd.f32 %v320, 1.0
  %v472 = vadd.f32 %v322, 1.0
  %v473 = vadd.f32 %v324, 1.0
  %v474 = vadd.f32 %v326, 1.0
  %v475 = vadd.f32 %v328, 1.0
  %v476 = vadd.f32 %v330, 1.0
  %v477 = vadd.f32 %v332, 1.0
  %v478 = vadd.f32 %v334, 1.0
  %v479 = vadd.f32 %v336, 1.0
  %v480 = vadd.f32 %v338, 1.0
  %v481 = vadd.f32 %v340, 1.0
  %v482 = vadd.f32 %v342, 1.0
  %v483 = vadd.f32 %v344, 1.0
  %v484 = vadd.f32 %v346, 1.0
  %v485 = vadd.f32 %v348, 1.0
  %v486 = vadd.f32 %v350, 1.0
  %v487 = vadd.f32 %v352, 1.0
  %v488 = vadd.f32 %v354, 1.0
  %v489 = vadd.f32 %v356, 1.0
  %v490 = vadd.f32 %v358, 1.0
  %v491 = vadd.f32 %v360, 1.0
  %v492 = vadd.f32 %v362, 1.0
  %v493 = vadd.f32 %v364, 1.0
  %v494 = vadd.f32 %v366, 1.0
  %v495 = vadd.f32 %v368, 1.0
  %v496 = vadd.f32 %v370, 1.0
  %v497 = vadd.f32 %v372, 1.0
  %v498 = vadd.f32 %v374, 1.0
  %v499 = vadd.f32 %v376, 1.0
  %v500 = vadd.f32 %v378, 1.0
  %v501 = vadd.f32 %v380, 1.0
  %v502 = vadd.f32 %v382, 1.0
  %v503 = vadd.f32 %v384, 1.0
  %v504 = vadd.f32 %v386, 1.0
  %v505 = vadd.f32 %v388, 1.0
  %v506 = vadd.f32 %v390, 1.0
  %v507 = vadd.f32 %v392, 1.0
  %v508 = vadd.f32 %v394, 1.0
  %v509 = vadd.f32 %v396, 1.0
  %v510 = vadd.f32 %v398, 1.0
  %v511 = vadd.f32 %v400, 1.0
  %v512 = vadd.f32 %v402, 1.0
  %v513 = vadd.f32 %v404, 1.0
  %v514 = vadd.f32 %v406, 1.0
  %v515 = vadd.f32 %v408, 1.0
  %v516 = vadd.f32 %v410, 1.0
  %v517 = vadd.f32 %v412, 1.0
  %v518 = vadd.f32 %v414, 1.0
  %v519 = vadd.f32 %v416, 1.0
  %v520 = vadd.f32 %v418, 1.0
  %v521 = vrcp.pop %v419
  %v522 = vmul.f32 1.0, %v521
  %v523 = vrcp.pop %v420
  %v524 = vmul.f32 1.0, %v523
  %v525 = vrcp.pop %v421
  %v526 = vmul.f32 1.0, %v525
  %v527 = vrcp.pop %v422
  %v528 = vmul.f32 1.0, %v527
  %v529 = vrcp.pop %v423
  %v530 = vmul.f32 1.0, %v529
  %v531 = vrcp.pop %v424
  %v532 = vmul.f32 1.0, %v531
  %v533 = vrcp.pop %v425
  %v534 = vmul.f32 1.0, %v533
  %v535 = vrcp.pop %v426
  %v536 = vmul.f32 1.0, %v535
  %v537 = vrcp.pop %v427
  %v538 = vmul.f32 1.0, %v537
  %v539 = vrcp.pop %v428
  %v540 = vmul.f32 1.0, %v539
  %v541 = vrcp.pop %v429
  %v542 = vmul.f32 1.0, %v541
  %v543 = vrcp.pop %v430
  %v544 = vmul.f32 1.0, %v543
  %v545 = vrcp.pop %v431
  %v546 = vmul.f32 1.0, %v545
  %v547 = vrcp.pop %v432
  %v548 = vmul.f32 1.0, %v547
  %v549 = vrcp.pop %v433
  %v550 = vmul.f32 1.0, %v549
  %v551 = vrcp.pop %v434
  %v552 = vmul.f32 1.0, %v551
  %v553 = vrcp.pop %v435
  %v554 = vmul.f32 1.0, %v553
  %v555 = vrcp.pop %v436
  %v556 = vmul.f32 1.0, %v555
  %v557 = vrcp.pop %v437
  %v558 = vmul.f32 1.0, %v557
  %v559 = vrcp.pop %v438
  %v560 = vmul.f32 1.0, %v559
  %v561 = vrcp.pop %v439
  %v562 = vmul.f32 1.0, %v561
  %v563 = vrcp.pop %v440
  %v564 = vmul.f32 1.0, %v563
  %v565 = vrcp.pop %v441
  %v566 = vmul.f32 1.0, %v565
  %v567 = vrcp.pop %v442
  %v568 = vmul.f32 1.0, %v567
  %v569 = vrcp.pop %v443
  %v570 = vmul.f32 1.0, %v569
  %v571 = vrcp.pop %v444
  %v572 = vmul.f32 1.0, %v571
  %v573 = vrcp.pop %v445
  %v574 = vmul.f32 1.0, %v573
  %v575 = vrcp.pop %v446
  %v576 = vmul.f32 1.0, %v575
  %v577 = vrcp.pop %v447
  %v578 = vmul.f32 1.0, %v577
  %v579 = vrcp.pop %v448
  %v580 = vmul.f32 1.0, %v579
  %v581 = vrcp.pop %v449
  %v582 = vmul.f32 1.0, %v581
  %v583 = vrcp.pop %v450
  %v584 = vmul.f32 1.0, %v583
  %v585 = vrcp.pop %v451
  %v586 = vmul.f32 1.0, %v585
  %v587 = vrcp.pop %v452
  %v588 = vmul.f32 1.0, %v587
  %v589 = vrcp.pop %v453
  %v590 = vmul.f32 1.0, %v589
  %v591 = vrcp.pop %v454
  %v592 = vmul.f32 1.0, %v591
  %v593 = vrcp.pop %v455
  %v594 = vmul.f32 1.0, %v593
  %v595 = vrcp.pop %v456
  %v596 = vmul.f32 1.0, %v595
  %v597 = vrcp.pop %v457
  %v598 = vmul.f32 1.0, %v597
  %v599 = vrcp.pop %v458
  %v600 = vmul.f32 1.0, %v599
  %v601 = vrcp.pop %v459
  %v602 = vmul.f32 1.0, %v601
  %v603 = vrcp.pop %v460
  %v604 = vmul.f32 1.0, %v603
  %v605 = vrcp.pop %v461
  %v606 = vmul.f32 1.0, %v605
  %v607 = vrcp.pop %v462
  %v608 = vmul.f32 1.0, %v607
  %v609 = vrcp.pop %v463
  %v610 = vmul.f32 1.0, %v609
  %v611 = vrcp.pop %v464
  %v612 = vmul.f32 1.0, %v611
  %v613 = vrcp.pop %v465
  %v614 = vmul.f32 1.0, %v613
  %v615 = vrcp.pop %v466
  %v616 = vmul.f32 1.0, %v615
  %v617 = vrcp.pop %v467
  %v618 = vmul.f32 1.0, %v617
  %v619 = vrcp.pop %v468
  %v620 = vmul.f32 1.0, %v619
  %v621 = vrcp.pop %v469
  %v622 = vmul.f32 1.0, %v621
  %v623 = vrcp.pop %v470
  %v624 = vmul.f32 1.0, %v623
  %v625 = vrcp.pop %v471
  %v626 = vmul.f32 1.0, %v625
  %v627 = vrcp.pop %v472
  %v628 = vmul.f32 1.0, %v627
  %v629 = vrcp.pop %v473
  %v630 = vmul.f32 1.0, %v629
  %v631 = vrcp.pop %v474
  %v632 = vmul.f32 1.0, %v631
  %v633 = vrcp.pop %v475
  %v634 = vmul.f32 1.0, %v633
  %v635 = vrcp.pop %v476
  %v636 = vmul.f32 1.0, %v635
  %v637 = vrcp.pop %v477
  %v638 = vmul.f32 1.0, %v637
  %v639 = vrcp.pop %v478
  %v640 = vmul.f32 1.0, %v639
  %v641 = vrcp.pop %v479
  %v642 = vmul.f32 1.0, %v641
  %v643 = vrcp.pop %v480
  %v644 = vmul.f32 1.0, %v643
  %v645 = vrcp.pop %v481
  %v646 = vmul.f32 1.0, %v645
  %v647 = vrcp.pop %v482
  %v648 = vmul.f32 1.0, %v647
  %v649 = vrcp.pop %v483
  %v650 = vmul.f32 1.0, %v649
  %v651 = vrcp.pop %v484
  %v652 = vmul.f32 1.0, %v651
  %v653 = vrcp.pop %v485
  %v654 = vmul.f32 1.0, %v653
  %v655 = vrcp.pop %v486
  %v656 = vmul.f32 1.0, %v655
  %v657 = vrcp.pop %v487
  %v658 = vmul.f32 1.0, %v657
  %v659 = vrcp.pop %v488
  %v660 = vmul.f32 1.0, %v659
  %v661 = vrcp.pop %v489
  %v662 = vmul.f32 1.0, %v661
  %v663 = vrcp.pop %v490
  %v664 = vmul.f32 1.0, %v663
  %v665 = vrcp.pop %v491
  %v666 = vmul.f32 1.0, %v665
  %v667 = vrcp.pop %v492
  %v668 = vmul.f32 1.0, %v667
  %v669 = vrcp.pop %v493
  %v670 = vmul.f32 1.0, %v669
  %v671 = vrcp.pop %v494
  %v672 = vmul.f32 1.0, %v671
  %v673 = vrcp.pop %v495
  %v674 = vmul.f32 1.0, %v673
  %v675 = vrcp.pop %v496
  %v676 = vmul.f32 1.0, %v675
  %v677 = vrcp.pop %v497
  %v678 = vmul.f32 1.0, %v677
  %v679 = vrcp.pop %v498
  %v680 = vmul.f32 1.0, %v679
  %v681 = vrcp.pop %v499
  %v682 = vmul.f32 1.0, %v681
  %v683 = vrcp.pop %v500
  %v684 = vmul.f32 1.0, %v683
  %v685 = vrcp.pop %v501
  %v686 = vmul.f32 1.0, %v685
  %v687 = vrcp.pop %v502
  %v688 = vmul.f32 1.0, %v687
  %v689 = vrcp.pop %v503
  %v690 = vmul.f32 1.0, %v689
  %v691 = vrcp.pop %v504
  %v692 = vmul.f32 1.0, %v691
  %v693 = vrcp.pop %v505
  %v694 = vmul.f32 1.0, %v693
  %v695 = vrcp.pop %v506
  %v696 = vmul.f32 1.0, %v695
  %v697 = vrcp.pop %v507
  %v698 = vmul.f32 1.0, %v697
  %v699 = vrcp.pop %v508
  %v700 = vmul.f32 1.0, %v699
  %v701 = vrcp.pop %v509
  %v702 = vmul.f32 1.0, %v701
  %v703 = vrcp.pop %v510
  %v704 = vmul.f32 1.0, %v703
  %v705 = vrcp.pop %v511
  %v706 = vmul.f32 1.0, %v705
  %v707 = vrcp.pop %v512
  %v708 = vmul.f32 1.0, %v707
  %v709 = vrcp.pop %v513
  %v710 = vmul.f32 1.0, %v709
  %v711 = vrcp.pop %v514
  %v712 = vmul.f32 1.0, %v711
  %v713 = vrcp.pop %v515
  %v714 = vmul.f32 1.0, %v713
  %v715 = vrcp.pop %v516
  %v716 = vmul.f32 1.0, %v715
  %v717 = vrcp.pop %v517
  %v718 = vmul.f32 1.0, %v717
  %v719 = vrcp.pop %v518
  %v720 = vmul.f32 1.0, %v719
  %v721 = vrcp.pop %v519
  %v722 = vmul.f32 1.0, %v721
  %v723 = vrcp.pop %v520
  %v724 = vmul.f32 1.0, %v723
  %v725 = vld [vmem:[%s1] sm:$0xff]
  %v726 = vld [vmem:[%s1 + $0x8] sm:$0xff]
  %v727 = vld [vmem:[%s1 + $0x10] sm:$0xff]
  %v728 = vld [vmem:[%s1 + $0x18] sm:$0xff]
  %v729 = vld [vmem:[%s1 + $0x20] sm:$0xff]
  %v730 = vld [vmem:[%s1 + $0x28] sm:$0xff]
  %v731 = vld [vmem:[%s1 + $0x30] sm:$0xff]
  %v732 = vld [vmem:[%s1 + $0x38] sm:$0xff]
  %v733 = vld [vmem:[%s1 + $0x40] sm:$0xff]
  %v734 = vld [vmem:[%s1 + $0x48] sm:$0xff]
  %v735 = vld [vmem:[%s1 + $0x50] sm:$0xff]
  %v736 = vld [vmem:[%s1 + $0x58] sm:$0xff]
  %v737 = vld [vmem:[%s1 + $0x60] sm:$0xff]
  %v738 = vld [vmem:[%s1 + $0x68] sm:$0xff]
  %v739 = vld [vmem:[%s1 + $0x70] sm:$0xff]
  %v740 = vld [vmem:[%s1 + $0x78] sm:$0xff]
  %v741 = vld [vmem:[%s1 + $0x80] sm:$0xff]
  %v742 = vld [vmem:[%s1 + $0x88] sm:$0xff]
  %v743 = vld [vmem:[%s1 + $0x90] sm:$0xff]
  %v744 = vld [vmem:[%s1 + $0x98] sm:$0xff]
  %v745 = vld [vmem:[%s1 + $0xa0] sm:$0xff]
  %v746 = vld [vmem:[%s1 + $0xa8] sm:$0xff]
  %v747 = vld [vmem:[%s1 + $0xb0] sm:$0xff]
  %v748 = vld [vmem:[%s1 + $0xb8] sm:$0xff]
  %v749 = vld [vmem:[%s1 + $0xc0] sm:$0xff]
  %v750 = vld [vmem:[%s1 + $0xc8] sm:$0xff]
  %v751 = vld [vmem:[%s1 + $0xd0] sm:$0xff]
  %v752 = vld [vmem:[%s1 + $0xd8] sm:$0xff]
  %v753 = vld [vmem:[%s1 + $0xe0] sm:$0xff]
  %v754 = vld [vmem:[%s1 + $0xe8] sm:$0xff]
  %v755 = vld [vmem:[%s1 + $0xf0] sm:$0xff]
  %v756 = vld [vmem:[%s1 + $0xf8] sm:$0xff]
  %v757 = vld [vmem:[%s1 + $0x100] sm:$0xff]
  %v758 = vld [vmem:[%s1 + $0x108] sm:$0xff]
  %v759 = vld [vmem:[%s1 + $0x110] sm:$0xff]
  %v760 = vld [vmem:[%s1 + $0x118] sm:$0xff]
  %v761 = vld [vmem:[%s1 + $0x120] sm:$0xff]
  %v762 = vld [vmem:[%s1 + $0x128] sm:$0xff]
  %v763 = vld [vmem:[%s1 + $0x130] sm:$0xff]
  %v764 = vld [vmem:[%s1 + $0x138] sm:$0xff]
  %v765 = vld [vmem:[%s1 + $0x140] sm:$0xff]
  %v766 = vld [vmem:[%s1 + $0x148] sm:$0xff]
  %v767 = vld [vmem:[%s1 + $0x150] sm:$0xff]
  %v768 = vld [vmem:[%s1 + $0x158] sm:$0xff]
  %v769 = vld [vmem:[%s1 + $0x160] sm:$0xff]
  %v770 = vld [vmem:[%s1 + $0x168] sm:$0xff]
  %v771 = vld [vmem:[%s1 + $0x170] sm:$0xff]
  %v772 = vld [vmem:[%s1 + $0x178] sm:$0xff]
  %v773 = vld [vmem:[%s1 + $0x180] sm:$0xff]
  %v774 = vld [vmem:[%s1 + $0x188] sm:$0xff]
  %v775 = vld [vmem:[%s1 + $0x190] sm:$0xff]
  %v776 = vld [vmem:[%s1 + $0x198] sm:$0xff]
  %v777 = vld [vmem:[%s1 + $0x1a0] sm:$0xff]
  %v778 = vld [vmem:[%s1 + $0x1a8] sm:$0xff]
  %v779 = vld [vmem:[%s1 + $0x1b0] sm:$0xff]
  %v780 = vld [vmem:[%s1 + $0x1b8] sm:$0xff]
  %v781 = vld [vmem:[%s1 + $0x1c0] sm:$0xff]
  %v782 = vld [vmem:[%s1 + $0x1c8] sm:$0xff]
  %v783 = vld [vmem:[%s1 + $0x1d0] sm:$0xff]
  %v784 = vld [vmem:[%s1 + $0x1d8] sm:$0xff]
  %v785 = vld [vmem:[%s1 + $0x1e0] sm:$0xff]
  %v786 = vld [vmem:[%s1 + $0x1e8] sm:$0xff]
  %v787 = vld [vmem:[%s1 + $0x1f0] sm:$0xff]
  %v788 = vld [vmem:[%s1 + $0x1f8] sm:$0xff]
  %v789 = vld [vmem:[%s1 + $0x200] sm:$0xff]
  %v790 = vld [vmem:[%s1 + $0x208] sm:$0xff]
  %v791 = vld [vmem:[%s1 + $0x210] sm:$0xff]
  %v792 = vld [vmem:[%s1 + $0x218] sm:$0xff]
  %v793 = vld [vmem:[%s1 + $0x220] sm:$0xff]
  %v794 = vld [vmem:[%s1 + $0x228] sm:$0xff]
  %v795 = vld [vmem:[%s1 + $0x230] sm:$0xff]
  %v796 = vld [vmem:[%s1 + $0x238] sm:$0xff]
  %v797 = vld [vmem:[%s1 + $0x240] sm:$0xff]
  %v798 = vld [vmem:[%s1 + $0x248] sm:$0xff]
  %v799 = vld [vmem:[%s1 + $0x250] sm:$0xff]
  %v800 = vld [vmem:[%s1 + $0x258] sm:$0xff]
  %v801 = vld [vmem:[%s1 + $0x260] sm:$0xff]
  %v802 = vld [vmem:[%s1 + $0x268] sm:$0xff]
  %v803 = vld [vmem:[%s1 + $0x270] sm:$0xff]
  %v804 = vld [vmem:[%s1 + $0x278] sm:$0xff]
  %v805 = vld [vmem:[%s1 + $0x280] sm:$0xff]
  %v806 = vld [vmem:[%s1 + $0x288] sm:$0xff]
  %v807 = vld [vmem:[%s1 + $0x290] sm:$0xff]
  %v808 = vld [vmem:[%s1 + $0x298] sm:$0xff]
  %v809 = vld [vmem:[%s1 + $0x2a0] sm:$0xff]
  %v810 = vld [vmem:[%s1 + $0x2a8] sm:$0xff]
  %v811 = vld [vmem:[%s1 + $0x2b0] sm:$0xff]
  %v812 = vld [vmem:[%s1 + $0x2b8] sm:$0xff]
  %v813 = vld [vmem:[%s1 + $0x2c0] sm:$0xff]
  %v814 = vld [vmem:[%s1 + $0x2c8] sm:$0xff]
  %v815 = vld [vmem:[%s1 + $0x2d0] sm:$0xff]
  %v816 = vld [vmem:[%s1 + $0x2d8] sm:$0xff]
  %v817 = vld [vmem:[%s1 + $0x2e0] sm:$0xff]
  %v818 = vld [vmem:[%s1 + $0x2e8] sm:$0xff]
  %v819 = vld [vmem:[%s1 + $0x2f0] sm:$0xff]
  %v820 = vld [vmem:[%s1 + $0x2f8] sm:$0xff]
  %v821 = vld [vmem:[%s1 + $0x300] sm:$0xff]
  %v822 = vld [vmem:[%s1 + $0x308] sm:$0xff]
  %v823 = vld [vmem:[%s1 + $0x310] sm:$0xff]
  %v824 = vld [vmem:[%s1 + $0x318] sm:$0xff]
  %v825 = vld [vmem:[%s1 + $0x320] sm:$0xff]
  %v826 = vld [vmem:[%s1 + $0x328] sm:$0xff]
  %828 = vset.pattern.permute.xlu0 0
  %829 = vperm.xlu0 %828, %v522
  %v830 = vpop.permute.xlu0 %829
  %833 = vset.pattern.permute.xlu0 0
  %834 = vperm.xlu0 %833, %v524
  %v835 = vpop.permute.xlu0 %834
  %838 = vset.pattern.permute.xlu0 0
  %839 = vperm.xlu0 %838, %v526
  %v840 = vpop.permute.xlu0 %839
  %843 = vset.pattern.permute.xlu0 0
  %844 = vperm.xlu0 %843, %v528
  %v845 = vpop.permute.xlu0 %844
  %848 = vset.pattern.permute.xlu0 0
  %849 = vperm.xlu0 %848, %v530
  %v850 = vpop.permute.xlu0 %849
  %853 = vset.pattern.permute.xlu0 0
  %854 = vperm.xlu0 %853, %v532
  %v855 = vpop.permute.xlu0 %854
  %858 = vset.pattern.permute.xlu0 0
  %859 = vperm.xlu0 %858, %v534
  %v860 = vpop.permute.xlu0 %859
  %863 = vset.pattern.permute.xlu0 0
  %864 = vperm.xlu0 %863, %v536
  %v865 = vpop.permute.xlu0 %864
  %868 = vset.pattern.permute.xlu0 0
  %869 = vperm.xlu0 %868, %v538
  %v870 = vpop.permute.xlu0 %869
  %873 = vset.pattern.permute.xlu0 0
  %874 = vperm.xlu0 %873, %v540
  %v875 = vpop.permute.xlu0 %874
  %878 = vset.pattern.permute.xlu0 0
  %879 = vperm.xlu0 %878, %v542
  %v880 = vpop.permute.xlu0 %879
  %883 = vset.pattern.permute.xlu0 0
  %884 = vperm.xlu0 %883, %v544
  %v885 = vpop.permute.xlu0 %884
  %888 = vset.pattern.permute.xlu0 0
  %889 = vperm.xlu0 %888, %v546
  %v890 = vpop.permute.xlu0 %889
  %893 = vset.pattern.permute.xlu0 0
  %894 = vperm.xlu0 %893, %v548
  %v895 = vpop.permute.xlu0 %894
  %898 = vset.pattern.permute.xlu0 0
  %899 = vperm.xlu0 %898, %v550
  %v900 = vpop.permute.xlu0 %899
  %903 = vset.pattern.permute.xlu0 0
  %904 = vperm.xlu0 %903, %v552
  %v905 = vpop.permute.xlu0 %904
  %908 = vset.pattern.permute.xlu0 0
  %909 = vperm.xlu0 %908, %v554
  %v910 = vpop.permute.xlu0 %909
  %913 = vset.pattern.permute.xlu0 0
  %914 = vperm.xlu0 %913, %v556
  %v915 = vpop.permute.xlu0 %914
  %918 = vset.pattern.permute.xlu0 0
  %919 = vperm.xlu0 %918, %v558
  %v920 = vpop.permute.xlu0 %919
  %923 = vset.pattern.permute.xlu0 0
  %924 = vperm.xlu0 %923, %v560
  %v925 = vpop.permute.xlu0 %924
  %928 = vset.pattern.permute.xlu0 0
  %929 = vperm.xlu0 %928, %v562
  %v930 = vpop.permute.xlu0 %929
  %933 = vset.pattern.permute.xlu0 0
  %934 = vperm.xlu0 %933, %v564
  %v935 = vpop.permute.xlu0 %934
  %938 = vset.pattern.permute.xlu0 0
  %939 = vperm.xlu0 %938, %v566
  %v940 = vpop.permute.xlu0 %939
  %943 = vset.pattern.permute.xlu0 0
  %944 = vperm.xlu0 %943, %v568
  %v945 = vpop.permute.xlu0 %944
  %948 = vset.pattern.permute.xlu0 0
  %949 = vperm.xlu0 %948, %v570
  %v950 = vpop.permute.xlu0 %949
  %953 = vset.pattern.permute.xlu0 0
  %954 = vperm.xlu0 %953, %v572
  %v955 = vpop.permute.xlu0 %954
  %958 = vset.pattern.permute.xlu0 0
  %959 = vperm.xlu0 %958, %v574
  %v960 = vpop.permute.xlu0 %959
  %963 = vset.pattern.permute.xlu0 0
  %964 = vperm.xlu0 %963, %v576
  %v965 = vpop.permute.xlu0 %964
  %968 = vset.pattern.permute.xlu0 0
  %969 = vperm.xlu0 %968, %v578
  %v970 = vpop.permute.xlu0 %969
  %973 = vset.pattern.permute.xlu0 0
  %974 = vperm.xlu0 %973, %v580
  %v975 = vpop.permute.xlu0 %974
  %978 = vset.pattern.permute.xlu0 0
  %979 = vperm.xlu0 %978, %v582
  %v980 = vpop.permute.xlu0 %979
  %983 = vset.pattern.permute.xlu0 0
  %984 = vperm.xlu0 %983, %v584
  %v985 = vpop.permute.xlu0 %984
  %988 = vset.pattern.permute.xlu0 0
  %989 = vperm.xlu0 %988, %v586
  %v990 = vpop.permute.xlu0 %989
  %993 = vset.pattern.permute.xlu0 0
  %994 = vperm.xlu0 %993, %v588
  %v995 = vpop.permute.xlu0 %994
  %998 = vset.pattern.permute.xlu0 0
  %999 = vperm.xlu0 %998, %v590
  %v1000 = vpop.permute.xlu0 %999
  %1003 = vset.pattern.permute.xlu0 0
  %1004 = vperm.xlu0 %1003, %v592
  %v1005 = vpop.permute.xlu0 %1004
  %1008 = vset.pattern.permute.xlu0 0
  %1009 = vperm.xlu0 %1008, %v594
  %v1010 = vpop.permute.xlu0 %1009
  %1013 = vset.pattern.permute.xlu0 0
  %1014 = vperm.xlu0 %1013, %v596
  %v1015 = vpop.permute.xlu0 %1014
  %1018 = vset.pattern.permute.xlu0 0
  %1019 = vperm.xlu0 %1018, %v598
  %v1020 = vpop.permute.xlu0 %1019
  %1023 = vset.pattern.permute.xlu0 0
  %1024 = vperm.xlu0 %1023, %v600
  %v1025 = vpop.permute.xlu0 %1024
  %1028 = vset.pattern.permute.xlu0 0
  %1029 = vperm.xlu0 %1028, %v602
  %v1030 = vpop.permute.xlu0 %1029
  %1033 = vset.pattern.permute.xlu0 0
  %1034 = vperm.xlu0 %1033, %v604
  %v1035 = vpop.permute.xlu0 %1034
  %1038 = vset.pattern.permute.xlu0 0
  %1039 = vperm.xlu0 %1038, %v606
  %v1040 = vpop.permute.xlu0 %1039
  %1043 = vset.pattern.permute.xlu0 0
  %1044 = vperm.xlu0 %1043, %v608
  %v1045 = vpop.permute.xlu0 %1044
  %1048 = vset.pattern.permute.xlu0 0
  %1049 = vperm.xlu0 %1048, %v610
  %v1050 = vpop.permute.xlu0 %1049
  %1053 = vset.pattern.permute.xlu0 0
  %1054 = vperm.xlu0 %1053, %v612
  %v1055 = vpop.permute.xlu0 %1054
  %1058 = vset.pattern.permute.xlu0 0
  %1059 = vperm.xlu0 %1058, %v614
  %v1060 = vpop.permute.xlu0 %1059
  %1063 = vset.pattern.permute.xlu0 0
  %1064 = vperm.xlu0 %1063, %v616
  %v1065 = vpop.permute.xlu0 %1064
  %1068 = vset.pattern.permute.xlu0 0
  %1069 = vperm.xlu0 %1068, %v618
  %v1070 = vpop.permute.xlu0 %1069
  %1073 = vset.pattern.permute.xlu0 0
  %1074 = vperm.xlu0 %1073, %v620
  %v1075 = vpop.permute.xlu0 %1074
  %1078 = vset.pattern.permute.xlu0 0
  %1079 = vperm.xlu0 %1078, %v622
  %v1080 = vpop.permute.xlu0 %1079
  %1083 = vset.pattern.permute.xlu0 0
  %1084 = vperm.xlu0 %1083, %v624
  %v1085 = vpop.permute.xlu0 %1084
  %1088 = vset.pattern.permute.xlu0 0
  %1089 = vperm.xlu0 %1088, %v626
  %v1090 = vpop.permute.xlu0 %1089
  %1093 = vset.pattern.permute.xlu0 0
  %1094 = vperm.xlu0 %1093, %v628
  %v1095 = vpop.permute.xlu0 %1094
  %1098 = vset.pattern.permute.xlu0 0
  %1099 = vperm.xlu0 %1098, %v630
  %v1100 = vpop.permute.xlu0 %1099
  %1103 = vset.pattern.permute.xlu0 0
  %1104 = vperm.xlu0 %1103, %v632
  %v1105 = vpop.permute.xlu0 %1104
  %1108 = vset.pattern.permute.xlu0 0
  %1109 = vperm.xlu0 %1108, %v634
  %v1110 = vpop.permute.xlu0 %1109
  %1113 = vset.pattern.permute.xlu0 0
  %1114 = vperm.xlu0 %1113, %v636
  %v1115 = vpop.permute.xlu0 %1114
  %1118 = vset.pattern.permute.xlu0 0
  %1119 = vperm.xlu0 %1118, %v638
  %v1120 = vpop.permute.xlu0 %1119
  %1123 = vset.pattern.permute.xlu0 0
  %1124 = vperm.xlu0 %1123, %v640
  %v1125 = vpop.permute.xlu0 %1124
  %1128 = vset.pattern.permute.xlu0 0
  %1129 = vperm.xlu0 %1128, %v642
  %v1130 = vpop.permute.xlu0 %1129
  %1133 = vset.pattern.permute.xlu0 0
  %1134 = vperm.xlu0 %1133, %v644
  %v1135 = vpop.permute.xlu0 %1134
  %1138 = vset.pattern.permute.xlu0 0
  %1139 = vperm.xlu0 %1138, %v646
  %v1140 = vpop.permute.xlu0 %1139
  %1143 = vset.pattern.permute.xlu0 0
  %1144 = vperm.xlu0 %1143, %v648
  %v1145 = vpop.permute.xlu0 %1144
  %1148 = vset.pattern.permute.xlu0 0
  %1149 = vperm.xlu0 %1148, %v650
  %v1150 = vpop.permute.xlu0 %1149
  %1153 = vset.pattern.permute.xlu0 0
  %1154 = vperm.xlu0 %1153, %v652
  %v1155 = vpop.permute.xlu0 %1154
  %1158 = vset.pattern.permute.xlu0 0
  %1159 = vperm.xlu0 %1158, %v654
  %v1160 = vpop.permute.xlu0 %1159
  %1163 = vset.pattern.permute.xlu0 0
  %1164 = vperm.xlu0 %1163, %v656
  %v1165 = vpop.permute.xlu0 %1164
  %1168 = vset.pattern.permute.xlu0 0
  %1169 = vperm.xlu0 %1168, %v658
  %v1170 = vpop.permute.xlu0 %1169
  %1173 = vset.pattern.permute.xlu0 0
  %1174 = vperm.xlu0 %1173, %v660
  %v1175 = vpop.permute.xlu0 %1174
  %1178 = vset.pattern.permute.xlu0 0
  %1179 = vperm.xlu0 %1178, %v662
  %v1180 = vpop.permute.xlu0 %1179
  %1183 = vset.pattern.permute.xlu0 0
  %1184 = vperm.xlu0 %1183, %v664
  %v1185 = vpop.permute.xlu0 %1184
  %1188 = vset.pattern.permute.xlu0 0
  %1189 = vperm.xlu0 %1188, %v666
  %v1190 = vpop.permute.xlu0 %1189
  %1193 = vset.pattern.permute.xlu0 0
  %1194 = vperm.xlu0 %1193, %v668
  %v1195 = vpop.permute.xlu0 %1194
  %1198 = vset.pattern.permute.xlu0 0
  %1199 = vperm.xlu0 %1198, %v670
  %v1200 = vpop.permute.xlu0 %1199
  %1203 = vset.pattern.permute.xlu0 0
  %1204 = vperm.xlu0 %1203, %v672
  %v1205 = vpop.permute.xlu0 %1204
  %1208 = vset.pattern.permute.xlu0 0
  %1209 = vperm.xlu0 %1208, %v674
  %v1210 = vpop.permute.xlu0 %1209
  %1213 = vset.pattern.permute.xlu0 0
  %1214 = vperm.xlu0 %1213, %v676
  %v1215 = vpop.permute.xlu0 %1214
  %1218 = vset.pattern.permute.xlu0 0
  %1219 = vperm.xlu0 %1218, %v678
  %v1220 = vpop.permute.xlu0 %1219
  %1223 = vset.pattern.permute.xlu0 0
  %1224 = vperm.xlu0 %1223, %v680
  %v1225 = vpop.permute.xlu0 %1224
  %1228 = vset.pattern.permute.xlu0 0
  %1229 = vperm.xlu0 %1228, %v682
  %v1230 = vpop.permute.xlu0 %1229
  %1233 = vset.pattern.permute.xlu0 0
  %1234 = vperm.xlu0 %1233, %v684
  %v1235 = vpop.permute.xlu0 %1234
  %1238 = vset.pattern.permute.xlu0 0
  %1239 = vperm.xlu0 %1238, %v686
  %v1240 = vpop.permute.xlu0 %1239
  %1243 = vset.pattern.permute.xlu0 0
  %1244 = vperm.xlu0 %1243, %v688
  %v1245 = vpop.permute.xlu0 %1244
  %1248 = vset.pattern.permute.xlu0 0
  %1249 = vperm.xlu0 %1248, %v690
  %v1250 = vpop.permute.xlu0 %1249
  %1253 = vset.pattern.permute.xlu0 0
  %1254 = vperm.xlu0 %1253, %v692
  %v1255 = vpop.permute.xlu0 %1254
  %1258 = vset.pattern.permute.xlu0 0
  %1259 = vperm.xlu0 %1258, %v694
  %v1260 = vpop.permute.xlu0 %1259
  %1263 = vset.pattern.permute.xlu0 0
  %1264 = vperm.xlu0 %1263, %v696
  %v1265 = vpop.permute.xlu0 %1264
  %1268 = vset.pattern.permute.xlu0 0
  %1269 = vperm.xlu0 %1268, %v698
  %v1270 = vpop.permute.xlu0 %1269
  %1273 = vset.pattern.permute.xlu0 0
  %1274 = vperm.xlu0 %1273, %v700
  %v1275 = vpop.permute.xlu0 %1274
  %1278 = vset.pattern.permute.xlu0 0
  %1279 = vperm.xlu0 %1278, %v702
  %v1280 = vpop.permute.xlu0 %1279
  %1283 = vset.pattern.permute.xlu0 0
  %1284 = vperm.xlu0 %1283, %v704
  %v1285 = vpop.permute.xlu0 %1284
  %1288 = vset.pattern.permute.xlu0 0
  %1289 = vperm.xlu0 %1288, %v706
  %v1290 = vpop.permute.xlu0 %1289
  %1293 = vset.pattern.permute.xlu0 0
  %1294 = vperm.xlu0 %1293, %v708
  %v1295 = vpop.permute.xlu0 %1294
  %1298 = vset.pattern.permute.xlu0 0
  %1299 = vperm.xlu0 %1298, %v710
  %v1300 = vpop.permute.xlu0 %1299
  %1303 = vset.pattern.permute.xlu0 0
  %1304 = vperm.xlu0 %1303, %v712
  %v1305 = vpop.permute.xlu0 %1304
  %1308 = vset.pattern.permute.xlu0 0
  %1309 = vperm.xlu0 %1308, %v714
  %v1310 = vpop.permute.xlu0 %1309
  %1313 = vset.pattern.permute.xlu0 0
  %1314 = vperm.xlu0 %1313, %v716
  %v1315 = vpop.permute.xlu0 %1314
  %1318 = vset.pattern.permute.xlu0 0
  %1319 = vperm.xlu0 %1318, %v718
  %v1320 = vpop.permute.xlu0 %1319
  %1323 = vset.pattern.permute.xlu0 0
  %1324 = vperm.xlu0 %1323, %v720
  %v1325 = vpop.permute.xlu0 %1324
  %1328 = vset.pattern.permute.xlu0 0
  %1329 = vperm.xlu0 %1328, %v722
  %v1330 = vpop.permute.xlu0 %1329
  %1333 = vset.pattern.permute.xlu0 0
  %1334 = vperm.xlu0 %1333, %v724
  %v1335 = vpop.permute.xlu0 %1334
  %v1337 = vmul.f32 %v830, %v725
  %v1338 = vmul.f32 %v835, %v726
  %v1339 = vmul.f32 %v840, %v727
  %v1340 = vmul.f32 %v845, %v728
  %v1341 = vmul.f32 %v850, %v729
  %v1342 = vmul.f32 %v855, %v730
  %v1343 = vmul.f32 %v860, %v731
  %v1344 = vmul.f32 %v865, %v732
  %v1345 = vmul.f32 %v870, %v733
  %v1346 = vmul.f32 %v875, %v734
  %v1347 = vmul.f32 %v880, %v735
  %v1348 = vmul.f32 %v885, %v736
  %v1349 = vmul.f32 %v890, %v737
  %v1350 = vmul.f32 %v895, %v738
  %v1351 = vmul.f32 %v900, %v739
  %v1352 = vmul.f32 %v905, %v740
  %v1353 = vmul.f32 %v910, %v741
  %v1354 = vmul.f32 %v915, %v742
  %v1355 = vmul.f32 %v920, %v743
  %v1356 = vmul.f32 %v925, %v744
  %v1357 = vmul.f32 %v930, %v745
  %v1358 = vmul.f32 %v935, %v746
  %v1359 = vmul.f32 %v940, %v747
  %v1360 = vmul.f32 %v945, %v748
  %v1361 = vmul.f32 %v950, %v749
  %v1362 = vmul.f32 %v955, %v750
  %v1363 = vmul.f32 %v960, %v751
  %v1364 = vmul.f32 %v965, %v752
  %v1365 = vmul.f32 %v970, %v753
  %v1366 = vmul.f32 %v975, %v754
  %v1367 = vmul.f32 %v980, %v755
  %v1368 = vmul.f32 %v985, %v756
  %v1369 = vmul.f32 %v990, %v757
  %v1370 = vmul.f32 %v995, %v758
  %v1371 = vmul.f32 %v1000, %v759
  %v1372 = vmul.f32 %v1005, %v760
  %v1373 = vmul.f32 %v1010, %v761
  %v1374 = vmul.f32 %v1015, %v762
  %v1375 = vmul.f32 %v1020, %v763
  %v1376 = vmul.f32 %v1025, %v764
  %v1377 = vmul.f32 %v1030, %v765
  %v1378 = vmul.f32 %v1035, %v766
  %v1379 = vmul.f32 %v1040, %v767
  %v1380 = vmul.f32 %v1045, %v768
  %v1381 = vmul.f32 %v1050, %v769
  %v1382 = vmul.f32 %v1055, %v770
  %v1383 = vmul.f32 %v1060, %v771
  %v1384 = vmul.f32 %v1065, %v772
  %v1385 = vmul.f32 %v1070, %v773
  %v1386 = vmul.f32 %v1075, %v774
  %v1387 = vmul.f32 %v1080, %v775
  %v1388 = vmul.f32 %v1085, %v776
  %v1389 = vmul.f32 %v1090, %v777
  %v1390 = vmul.f32 %v1095, %v778
  %v1391 = vmul.f32 %v1100, %v779
  %v1392 = vmul.f32 %v1105, %v780
  %v1393 = vmul.f32 %v1110, %v781
  %v1394 = vmul.f32 %v1115, %v782
  %v1395 = vmul.f32 %v1120, %v783
  %v1396 = vmul.f32 %v1125, %v784
  %v1397 = vmul.f32 %v1130, %v785
  %v1398 = vmul.f32 %v1135, %v786
  %v1399 = vmul.f32 %v1140, %v787
  %v1400 = vmul.f32 %v1145, %v788
  %v1401 = vmul.f32 %v1150, %v789
  %v1402 = vmul.f32 %v1155, %v790
  %v1403 = vmul.f32 %v1160, %v791
  %v1404 = vmul.f32 %v1165, %v792
  %v1405 = vmul.f32 %v1170, %v793
  %v1406 = vmul.f32 %v1175, %v794
  %v1407 = vmul.f32 %v1180, %v795
  %v1408 = vmul.f32 %v1185, %v796
  %v1409 = vmul.f32 %v1190, %v797
  %v1410 = vmul.f32 %v1195, %v798
  %v1411 = vmul.f32 %v1200, %v799
  %v1412 = vmul.f32 %v1205, %v800
  %v1413 = vmul.f32 %v1210, %v801
  %v1414 = vmul.f32 %v1215, %v802
  %v1415 = vmul.f32 %v1220, %v803
  %v1416 = vmul.f32 %v1225, %v804
  %v1417 = vmul.f32 %v1230, %v805
  %v1418 = vmul.f32 %v1235, %v806
  %v1419 = vmul.f32 %v1240, %v807
  %v1420 = vmul.f32 %v1245, %v808
  %v1421 = vmul.f32 %v1250, %v809
  %v1422 = vmul.f32 %v1255, %v810
  %v1423 = vmul.f32 %v1260, %v811
  %v1424 = vmul.f32 %v1265, %v812
  %v1425 = vmul.f32 %v1270, %v813
  %v1426 = vmul.f32 %v1275, %v814
  %v1427 = vmul.f32 %v1280, %v815
  %v1428 = vmul.f32 %v1285, %v816
  %v1429 = vmul.f32 %v1290, %v817
  %v1430 = vmul.f32 %v1295, %v818
  %v1431 = vmul.f32 %v1300, %v819
  %v1432 = vmul.f32 %v1305, %v820
  %v1433 = vmul.f32 %v1310, %v821
  %v1434 = vmul.f32 %v1315, %v822
  %v1435 = vmul.f32 %v1320, %v823
  %v1436 = vmul.f32 %v1325, %v824
  %v1437 = vmul.f32 %v1330, %v825
  %v1438 = vmul.f32 %v1335, %v826
  %vm1439 = vcmask 400384
  %1440 = vst.msk [vmem:[%s2] sm:$0xff] %vm1439, %v1337
  %1441 = vst.msk [vmem:[%s2 + $0x8] sm:$0xff] %vm1439, %v1338
  %1442 = vst.msk [vmem:[%s2 + $0x10] sm:$0xff] %vm1439, %v1339
  %1443 = vst.msk [vmem:[%s2 + $0x18] sm:$0xff] %vm1439, %v1340
  %1444 = vst.msk [vmem:[%s2 + $0x20] sm:$0xff] %vm1439, %v1341
  %1445 = vst.msk [vmem:[%s2 + $0x28] sm:$0xff] %vm1439, %v1342
  %1446 = vst.msk [vmem:[%s2 + $0x30] sm:$0xff] %vm1439, %v1343
  %1447 = vst.msk [vmem:[%s2 + $0x38] sm:$0xff] %vm1439, %v1344
  %1448 = vst.msk [vmem:[%s2 + $0x40] sm:$0xff] %vm1439, %v1345
  %1449 = vst.msk [vmem:[%s2 + $0x48] sm:$0xff] %vm1439, %v1346
  %1450 = vst.msk [vmem:[%s2 + $0x50] sm:$0xff] %vm1439, %v1347
  %1451 = vst.msk [vmem:[%s2 + $0x58] sm:$0xff] %vm1439, %v1348
  %1452 = vst.msk [vmem:[%s2 + $0x60] sm:$0xff] %vm1439, %v1349
  %1453 = vst.msk [vmem:[%s2 + $0x68] sm:$0xff] %vm1439, %v1350
  %1454 = vst.msk [vmem:[%s2 + $0x70] sm:$0xff] %vm1439, %v1351
  %1455 = vst.msk [vmem:[%s2 + $0x78] sm:$0xff] %vm1439, %v1352
  %1456 = vst.msk [vmem:[%s2 + $0x80] sm:$0xff] %vm1439, %v1353
  %1457 = vst.msk [vmem:[%s2 + $0x88] sm:$0xff] %vm1439, %v1354
  %1458 = vst.msk [vmem:[%s2 + $0x90] sm:$0xff] %vm1439, %v1355
  %1459 = vst.msk [vmem:[%s2 + $0x98] sm:$0xff] %vm1439, %v1356
  %1460 = vst.msk [vmem:[%s2 + $0xa0] sm:$0xff] %vm1439, %v1357
  %1461 = vst.msk [vmem:[%s2 + $0xa8] sm:$0xff] %vm1439, %v1358
  %1462 = vst.msk [vmem:[%s2 + $0xb0] sm:$0xff] %vm1439, %v1359
  %1463 = vst.msk [vmem:[%s2 + $0xb8] sm:$0xff] %vm1439, %v1360
  %1464 = vst.msk [vmem:[%s2 + $0xc0] sm:$0xff] %vm1439, %v1361
  %1465 = vst.msk [vmem:[%s2 + $0xc8] sm:$0xff] %vm1439, %v1362
  %1466 = vst.msk [vmem:[%s2 + $0xd0] sm:$0xff] %vm1439, %v1363
  %1467 = vst.msk [vmem:[%s2 + $0xd8] sm:$0xff] %vm1439, %v1364
  %1468 = vst.msk [vmem:[%s2 + $0xe0] sm:$0xff] %vm1439, %v1365
  %1469 = vst.msk [vmem:[%s2 + $0xe8] sm:$0xff] %vm1439, %v1366
  %1470 = vst.msk [vmem:[%s2 + $0xf0] sm:$0xff] %vm1439, %v1367
  %1471 = vst.msk [vmem:[%s2 + $0xf8] sm:$0xff] %vm1439, %v1368
  %1472 = vst.msk [vmem:[%s2 + $0x100] sm:$0xff] %vm1439, %v1369
  %1473 = vst.msk [vmem:[%s2 + $0x108] sm:$0xff] %vm1439, %v1370
  %1474 = vst.msk [vmem:[%s2 + $0x110] sm:$0xff] %vm1439, %v1371
  %1475 = vst.msk [vmem:[%s2 + $0x118] sm:$0xff] %vm1439, %v1372
  %1476 = vst.msk [vmem:[%s2 + $0x120] sm:$0xff] %vm1439, %v1373
  %1477 = vst.msk [vmem:[%s2 + $0x128] sm:$0xff] %vm1439, %v1374
  %1478 = vst.msk [vmem:[%s2 + $0x130] sm:$0xff] %vm1439, %v1375
  %1479 = vst.msk [vmem:[%s2 + $0x138] sm:$0xff] %vm1439, %v1376
  %1480 = vst.msk [vmem:[%s2 + $0x140] sm:$0xff] %vm1439, %v1377
  %1481 = vst.msk [vmem:[%s2 + $0x148] sm:$0xff] %vm1439, %v1378
  %1482 = vst.msk [vmem:[%s2 + $0x150] sm:$0xff] %vm1439, %v1379
  %1483 = vst.msk [vmem:[%s2 + $0x158] sm:$0xff] %vm1439, %v1380
  %1484 = vst.msk [vmem:[%s2 + $0x160] sm:$0xff] %vm1439, %v1381
  %1485 = vst.msk [vmem:[%s2 + $0x168] sm:$0xff] %vm1439, %v1382
  %1486 = vst.msk [vmem:[%s2 + $0x170] sm:$0xff] %vm1439, %v1383
  %1487 = vst.msk [vmem:[%s2 + $0x178] sm:$0xff] %vm1439, %v1384
  %1488 = vst.msk [vmem:[%s2 + $0x180] sm:$0xff] %vm1439, %v1385
  %1489 = vst.msk [vmem:[%s2 + $0x188] sm:$0xff] %vm1439, %v1386
  %1490 = vst.msk [vmem:[%s2 + $0x190] sm:$0xff] %vm1439, %v1387
  %1491 = vst.msk [vmem:[%s2 + $0x198] sm:$0xff] %vm1439, %v1388
  %1492 = vst.msk [vmem:[%s2 + $0x1a0] sm:$0xff] %vm1439, %v1389
  %1493 = vst.msk [vmem:[%s2 + $0x1a8] sm:$0xff] %vm1439, %v1390
  %1494 = vst.msk [vmem:[%s2 + $0x1b0] sm:$0xff] %vm1439, %v1391
  %1495 = vst.msk [vmem:[%s2 + $0x1b8] sm:$0xff] %vm1439, %v1392
  %1496 = vst.msk [vmem:[%s2 + $0x1c0] sm:$0xff] %vm1439, %v1393
  %1497 = vst.msk [vmem:[%s2 + $0x1c8] sm:$0xff] %vm1439, %v1394
  %1498 = vst.msk [vmem:[%s2 + $0x1d0] sm:$0xff] %vm1439, %v1395
  %1499 = vst.msk [vmem:[%s2 + $0x1d8] sm:$0xff] %vm1439, %v1396
  %1500 = vst.msk [vmem:[%s2 + $0x1e0] sm:$0xff] %vm1439, %v1397
  %1501 = vst.msk [vmem:[%s2 + $0x1e8] sm:$0xff] %vm1439, %v1398
  %1502 = vst.msk [vmem:[%s2 + $0x1f0] sm:$0xff] %vm1439, %v1399
  %1503 = vst.msk [vmem:[%s2 + $0x1f8] sm:$0xff] %vm1439, %v1400
  %1504 = vst.msk [vmem:[%s2 + $0x200] sm:$0xff] %vm1439, %v1401
  %1505 = vst.msk [vmem:[%s2 + $0x208] sm:$0xff] %vm1439, %v1402
  %1506 = vst.msk [vmem:[%s2 + $0x210] sm:$0xff] %vm1439, %v1403
  %1507 = vst.msk [vmem:[%s2 + $0x218] sm:$0xff] %vm1439, %v1404
  %1508 = vst.msk [vmem:[%s2 + $0x220] sm:$0xff] %vm1439, %v1405
  %1509 = vst.msk [vmem:[%s2 + $0x228] sm:$0xff] %vm1439, %v1406
  %1510 = vst.msk [vmem:[%s2 + $0x230] sm:$0xff] %vm1439, %v1407
  %1511 = vst.msk [vmem:[%s2 + $0x238] sm:$0xff] %vm1439, %v1408
  %1512 = vst.msk [vmem:[%s2 + $0x240] sm:$0xff] %vm1439, %v1409
  %1513 = vst.msk [vmem:[%s2 + $0x248] sm:$0xff] %vm1439, %v1410
  %1514 = vst.msk [vmem:[%s2 + $0x250] sm:$0xff] %vm1439, %v1411
  %1515 = vst.msk [vmem:[%s2 + $0x258] sm:$0xff] %vm1439, %v1412
  %1516 = vst.msk [vmem:[%s2 + $0x260] sm:$0xff] %vm1439, %v1413
  %1517 = vst.msk [vmem:[%s2 + $0x268] sm:$0xff] %vm1439, %v1414
  %1518 = vst.msk [vmem:[%s2 + $0x270] sm:$0xff] %vm1439, %v1415
  %1519 = vst.msk [vmem:[%s2 + $0x278] sm:$0xff] %vm1439, %v1416
  %1520 = vst.msk [vmem:[%s2 + $0x280] sm:$0xff] %vm1439, %v1417
  %1521 = vst.msk [vmem:[%s2 + $0x288] sm:$0xff] %vm1439, %v1418
  %1522 = vst.msk [vmem:[%s2 + $0x290] sm:$0xff] %vm1439, %v1419
  %1523 = vst.msk [vmem:[%s2 + $0x298] sm:$0xff] %vm1439, %v1420
  %1524 = vst.msk [vmem:[%s2 + $0x2a0] sm:$0xff] %vm1439, %v1421
  %1525 = vst.msk [vmem:[%s2 + $0x2a8] sm:$0xff] %vm1439, %v1422
  %1526 = vst.msk [vmem:[%s2 + $0x2b0] sm:$0xff] %vm1439, %v1423
  %1527 = vst.msk [vmem:[%s2 + $0x2b8] sm:$0xff] %vm1439, %v1424
  %1528 = vst.msk [vmem:[%s2 + $0x2c0] sm:$0xff] %vm1439, %v1425
  %1529 = vst.msk [vmem:[%s2 + $0x2c8] sm:$0xff] %vm1439, %v1426
  %1530 = vst.msk [vmem:[%s2 + $0x2d0] sm:$0xff] %vm1439, %v1427
  %1531 = vst.msk [vmem:[%s2 + $0x2d8] sm:$0xff] %vm1439, %v1428
  %1532 = vst.msk [vmem:[%s2 + $0x2e0] sm:$0xff] %vm1439, %v1429
  %1533 = vst.msk [vmem:[%s2 + $0x2e8] sm:$0xff] %vm1439, %v1430
  %1534 = vst.msk [vmem:[%s2 + $0x2f0] sm:$0xff] %vm1439, %v1431
  %1535 = vst.msk [vmem:[%s2 + $0x2f8] sm:$0xff] %vm1439, %v1432
  %1536 = vst.msk [vmem:[%s2 + $0x300] sm:$0xff] %vm1439, %v1433
  %1537 = vst.msk [vmem:[%s2 + $0x308] sm:$0xff] %vm1439, %v1434
  %1538 = vst.msk [vmem:[%s2 + $0x310] sm:$0xff] %vm1439, %v1435
  %1539 = vst.msk [vmem:[%s2 + $0x318] sm:$0xff] %vm1439, %v1436
  %1540 = vst.msk [vmem:[%s2 + $0x320] sm:$0xff] %vm1439, %v1437
  %1541 = vst.msk [vmem:[%s2 + $0x328] sm:$0xff] %vm1439, %v1438
  // Predicated region
  $region10: #{tpu_custom_call.1} parent=0 // pred_check
    _
  $region11: #{tpu_custom_call.1} parent=0 // pred_check_branch
    %1543 = sbr.rel (0) target = $region13
  $region12: #{tpu_custom_call.1} parent=0 // pred_region
    _
  $region13: #{tpu_custom_call.1} parent=0 // pred_fallthru
    _
  // Predicated region
  $region14: #{tpu_custom_call.1} parent=0 // pred_check
    _
  $region15: #{tpu_custom_call.1} parent=0 // pred_check_branch
    %1545 = sbr.rel (0) target = $region17
  $region16: #{tpu_custom_call.1} parent=0 // pred_region
    _
  $region17: #{tpu_custom_call.1} parent=0 // pred_fallthru
    _

</llo_original>
